<compile_context>
chip_gen: v5e
topology: v5e:2x2
jax: 0.10.0
libtpu: 0.0.40
codegen_flags: <defaults>
</compile_context>

<pallas_src>
import functools
import math

import numpy as np
import jax
import jax.numpy as jnp
from jax.experimental import pallas as pl
from jax.experimental.pallas import tpu as pltpu


def _causal_conv_kernel(x_cur_ref, x_prev_ref, w_ref, b_ref, o_ref, *,
                        K, dilation, pad):
    """One (batch, time-tile) grid step.

    x_cur_ref : (1, C_in, T_blk)   current time tile, NCT (time on lanes)
    x_prev_ref: (1, C_in, T_blk)   previous time tile (index clamped at ti == 0)
    w_ref     : (C_out, K * C_in)  conv taps flattened for a single fused dot
    b_ref     : (C_out, 1)
    o_ref     : (1, C_out, T_blk)
    """
    T_blk = o_ref.shape[-1]
    cur = x_cur_ref[0]                                       # (C_in, T_blk)

    if pad > 0:
        # Halo = last `pad` frames of the previous time tile; zero on the first
        # tile -> causal left zero-padding handled entirely in-kernel.
        halo = x_prev_ref[0, :, T_blk - pad:]                # (C_in, pad)
        halo = halo * (pl.program_id(1) > 0).astype(halo.dtype)
        slab = jnp.concatenate([halo, cur], axis=-1)         # (C_in, T_blk + pad)
    else:
        slab = cur

    # im2col: the K dilated time-shifts stacked along the contraction axis, then a
    # single MXU matmul (contraction depth K*C_in) instead of K shallow dots.
    taps = [slab[:, j * dilation: j * dilation + T_blk] for j in range(K)]
    im2col = jnp.concatenate(taps, axis=0) if K > 1 else taps[0]   # (K*C_in, T_blk)

    acc = jnp.dot(w_ref[...], im2col, preferred_element_type=jnp.float32)
    o_ref[0] = (acc + b_ref[...].astype(jnp.float32)).astype(o_ref.dtype)


def causal_conv1d(x_nct, weight, bias, *, dilation=1, time_block=512):
    """Causal conv1d.

    x_nct  : (B, C_in, T)      PyTorch NCT layout (kept end-to-end: no transposes)
    weight : (C_out, C_in, K)  PyTorch Conv1d weight layout
    bias   : (C_out,)
    returns: (B, C_out, T)
    """
    B, C_in, T = x_nct.shape
    C_out, _, K = weight.shape
    pad = (K - 1) * dilation

    # Lane-dense time tile: a multiple of 128, or the full (small) sequence.
    if T <= time_block:
        T_blk, T_pad = T, T
        x_in = x_nct
    else:
        assert time_block % 128 == 0, "time_block must be a multiple of 128"
        T_blk = time_block
        T_pad = ((T + T_blk - 1) // T_blk) * T_blk
        x_in = x_nct if T_pad == T else jnp.pad(
            x_nct, ((0, 0), (0, 0), (0, T_pad - T)))
    assert pad <= T_blk, "halo (pad) must fit inside one previous time tile"
    n_t = T_pad // T_blk

    # Tiny, weight-only reshapes (no activation HBM passes).
    w2d = jnp.transpose(weight, (0, 2, 1)).reshape(C_out, K * C_in)
    b2d = bias.reshape(C_out, 1)

    kernel = functools.partial(_causal_conv_kernel, K=K, dilation=dilation, pad=pad)

    y = pl.pallas_call(
        kernel,
        out_shape=jax.ShapeDtypeStruct((B, C_out, T_pad), x_nct.dtype),
        grid_spec=pltpu.PrefetchScalarGridSpec(
            num_scalar_prefetch=0,
            grid=(B, n_t),
            in_specs=[
                # current time tile
                pl.BlockSpec((1, C_in, T_blk), lambda b, ti: (b, 0, ti)),
                # previous time tile (halo source), clamped at the left edge
                pl.BlockSpec((1, C_in, T_blk),
                             lambda b, ti: (b, 0, jnp.maximum(ti - 1, 0))),
                # constant block indices -> Pallas skips re-DMAing these each step
                pl.BlockSpec((C_out, K * C_in), lambda b, ti: (0, 0)),
                pl.BlockSpec((C_out, 1), lambda b, ti: (0, 0)),
            ],
            out_specs=pl.BlockSpec((1, C_out, T_blk), lambda b, ti: (b, 0, ti)),
        ),
        compiler_params=pltpu.CompilerParams(
            # Both grid axes are independent -> sharded across v7x's two TensorCores.
            dimension_semantics=("parallel", "parallel"),
            # Explicit scoped-VMEM cap; safe on v5e/v6e (128 MiB) and v7x (64 MiB).
            vmem_limit_bytes=32 * 1024 * 1024,
        ),
    )(x_in, x_in, w2d, b2d)

    return y if T_pad == T else y[:, :, :T]


def _reference_causal_conv1d(x_nct, weight, bias, *, dilation=1):
    """Plain-JAX reference: PyTorch Conv1d(padding=pad) then [..., :-pad]
    == conv with left-only padding (also correct when pad == 0)."""
    K = weight.shape[-1]
    pad = (K - 1) * dilation
    y = jax.lax.conv_general_dilated(
        x_nct, weight,
        window_strides=(1,),
        padding=[(pad, 0)],
        rhs_dilation=(dilation,),
        dimension_numbers=("NCH", "OIH", "NCH"),
    )
    return y + bias[None, :, None]


if __name__ == "__main__":
    def make_inputs(key, B, C_in, C_out, T, K):
        kx, kw, kb = jax.random.split(key, 3)
        x = jax.random.normal(kx, (B, C_in, T), dtype=jnp.float32)
        # PyTorch-style init: U(-bound, bound), bound = 1/sqrt(C_in*K)
        bound = 1.0 / math.sqrt(C_in * K)
        w = jax.random.uniform(kw, (C_out, C_in, K), minval=-bound, maxval=bound,
                               dtype=jnp.float32)
        b = jax.random.uniform(kb, (C_out,), minval=-bound, maxval=bound,
                               dtype=jnp.float32)
        return x, w, b

    key = jax.random.PRNGKey(0)
    k1, k2 = jax.random.split(key)

    # Small shape consistent with the module: (B, C_in, T) = (2, 4, 16), K = 3.
    x, w, b = make_inputs(k1, 2, 4, 8, 16, 3)
    y = jax.block_until_ready(causal_conv1d(x, w, b, dilation=1))
    y_ref = _reference_causal_conv1d(x, w, b, dilation=1)
    np.testing.assert_allclose(np.asarray(y), np.asarray(y_ref),
                               rtol=1e-5, atol=1e-5)

    # Exercise the tiled path: multiple time tiles, cross-tile halo, dilation = 2.
    x2, w2, b2 = make_inputs(k2, 2, 4, 8, 300, 3)
    y2 = jax.block_until_ready(causal_conv1d(x2, w2, b2, dilation=2,
                                             time_block=128))
    y2_ref = _reference_causal_conv1d(x2, w2, b2, dilation=2)
    np.testing.assert_allclose(np.asarray(y2), np.asarray(y2_ref),
                               rtol=1e-5, atol=1e-5)

    print("KERNEL_OK")
</pallas_src>

<mosaic_0001>
module attributes {stable_mosaic.version = 11 : i64} {
  func.func @_causal_conv_kernel(%arg0: i32, %arg1: i32, %arg2: memref<1x4x16xf32, #tpu.memory_space<vmem>>, %arg3: memref<1x4x16xf32, #tpu.memory_space<vmem>>, %arg4: memref<8x12xf32, #tpu.memory_space<vmem>>, %arg5: memref<8x1xf32, #tpu.memory_space<vmem>>, %arg6: memref<1x8x16xf32, #tpu.memory_space<vmem>>) attributes {dimension_semantics = [#tpu.dimension_semantics<parallel>, #tpu.dimension_semantics<parallel>], iteration_bounds = array<i64: 2, 1>, scalar_prefetch = 0 : i64, scratch_operands = 0 : i64, tpu.core_type = #tpu.core_type<tc>, window_params = [{transform_indices = @transform_0, window_bounds = array<i64: 1, 4, 16>}, {transform_indices = @transform_1, window_bounds = array<i64: 1, 4, 16>}, {pipeline_mode = #tpu.pipeline_mode<synchronous>, transform_indices = @transform_2, window_bounds = array<i64: 8, 12>}, {pipeline_mode = #tpu.pipeline_mode<synchronous>, transform_indices = @transform_3, window_bounds = array<i64: 8, 1>}, {transform_indices = @transform_4, window_bounds = array<i64: 1, 8, 16>}]} {
    %c0 = arith.constant 0 : index
    %c0_0 = arith.constant 0 : index
    %c0_1 = arith.constant 0 : index
    %0 = vector.load %arg2[%c0, %c0_0, %c0_1] : memref<1x4x16xf32, #tpu.memory_space<vmem>>, vector<1x4x16xf32>
    %1 = vector.shape_cast %0 : vector<1x4x16xf32> to vector<4x16xf32>
    %c0_2 = arith.constant 0 : index
    %c0_3 = arith.constant 0 : index
    %c14 = arith.constant 14 : index
    %2 = vector.load %arg3[%c0_2, %c0_3, %c14] : memref<1x4x16xf32, #tpu.memory_space<vmem>>, vector<1x4x2xf32>
    %3 = vector.shape_cast %2 : vector<1x4x2xf32> to vector<4x2xf32>
    %c0_i32 = arith.constant 0 : i32
    %4 = arith.cmpi sgt, %arg1, %c0_i32 : i32
    %5 = arith.extui %4 : i1 to i32
    %6 = arith.sitofp %5 : i32 to f32
    %7 = vector.broadcast %6 : f32 to vector<4x2xf32>
    %8 = arith.mulf %3, %7 : vector<4x2xf32>
    %9 = tpu.concatenate %8, %1 in 1 : vector<4x2xf32>, vector<4x16xf32> -> vector<4x18xf32>
    %10 = vector.extract_strided_slice %9 {offsets = [0, 0], sizes = [4, 16], strides = [1, 1]} : vector<4x18xf32> to vector<4x16xf32>
    %11 = vector.extract_strided_slice %9 {offsets = [0, 1], sizes = [4, 16], strides = [1, 1]} : vector<4x18xf32> to vector<4x16xf32>
    %12 = vector.extract_strided_slice %9 {offsets = [0, 2], sizes = [4, 16], strides = [1, 1]} : vector<4x18xf32> to vector<4x16xf32>
    %13 = tpu.concatenate %10, %11, %12 in 0 : vector<4x16xf32>, vector<4x16xf32>, vector<4x16xf32> -> vector<12x16xf32>
    %c0_4 = arith.constant 0 : index
    %c0_5 = arith.constant 0 : index
    %14 = vector.load %arg4[%c0_4, %c0_5] : memref<8x12xf32, #tpu.memory_space<vmem>>, vector<8x12xf32>
    %cst = arith.constant dense<0.000000e+00> : vector<8x16xf32>
    %15 = tpu.matmul %14, %13, %cst {dimension_numbers = #tpu.dot_dimension_numbers<[1], [0], [0], [1], [0, 0, 1, 1], [], []>} : vector<8x12xf32>, vector<12x16xf32>, vector<8x16xf32> -> vector<8x16xf32>
    %c0_6 = arith.constant 0 : index
    %c0_7 = arith.constant 0 : index
    %16 = vector.load %arg5[%c0_6, %c0_7] : memref<8x1xf32, #tpu.memory_space<vmem>>, vector<8x1xf32>
    %17 = vector.broadcast %16 : vector<8x1xf32> to vector<8x16xf32>
    %18 = arith.addf %15, %17 : vector<8x16xf32>
    %c0_8 = arith.constant 0 : index
    %c0_9 = arith.constant 0 : index
    %c0_10 = arith.constant 0 : index
    %19 = vector.load %arg6[%c0_8, %c0_9, %c0_10] : memref<1x8x16xf32, #tpu.memory_space<vmem>>, vector<1x8x16xf32>
    %20 = vector.shape_cast %19 : vector<1x8x16xf32> to vector<8x16xf32>
    %21 = vector.shape_cast %18 : vector<8x16xf32> to vector<1x8x16xf32>
    tpu.vector_store %arg6[%c0_8, %c0_9, %c0_10], %21 {strides = array<i32>} : memref<1x8x16xf32, #tpu.memory_space<vmem>>, vector<1x8x16xf32>,
    return
  }
  func.func @transform_0(%arg0: i32, %arg1: i32) -> (i32, i32, i32) {
    %c0_i32 = arith.constant 0 : i32
    %c0_i32_0 = arith.constant 0 : i32
    return %arg0, %c0_i32, %arg1 : i32, i32, i32
  }
  func.func @transform_1(%arg0: i32, %arg1: i32) -> (i32, i32, i32) {
    %c1_i32 = arith.constant 1 : i32
    %0 = arith.subi %arg1, %c1_i32 : i32
    %c0_i32 = arith.constant 0 : i32
    %1 = arith.maxsi %0, %c0_i32 : i32
    %c0_i32_0 = arith.constant 0 : i32
    %c0_i32_1 = arith.constant 0 : i32
    return %arg0, %c0_i32_0, %1 : i32, i32, i32
  }
  func.func @transform_2(%arg0: i32, %arg1: i32) -> (i32, i32) {
    %c0_i32 = arith.constant 0 : i32
    %c0_i32_0 = arith.constant 0 : i32
    %c0_i32_1 = arith.constant 0 : i32
    return %c0_i32, %c0_i32_0 : i32, i32
  }
  func.func @transform_3(%arg0: i32, %arg1: i32) -> (i32, i32) {
    %c0_i32 = arith.constant 0 : i32
    %c0_i32_0 = arith.constant 0 : i32
    %c0_i32_1 = arith.constant 0 : i32
    return %c0_i32, %c0_i32_0 : i32, i32
  }
  func.func @transform_4(%arg0: i32, %arg1: i32) -> (i32, i32, i32) {
    %c0_i32 = arith.constant 0 : i32
    %c0_i32_0 = arith.constant 0 : i32
    return %arg0, %c0_i32, %arg1 : i32, i32, i32
  }
}

</mosaic_0001>

<llo_original>
// kernel: tpu_custom_call.1
$region0: #{tpu_custom_call.1}
  #allocation0 [shape = 'u32[]', space=smem, size = 0x4, offset = 0x4, fixed_abs, tag = 'smem constant byte address 0x4 - core index']
  #allocation1 [shape = 'u32[72,128]{1,0:T(1,128)}', space=vmem, size = 0x9000, scoped, tag = 'internal scratch']
  %s0 = inlined_call_operand.vmem [shape: f32[2,4,16], index: 0, kind: input, shape index: {}]
  %s1 = inlined_call_operand.hbm [shape: f32[2,4,16], index: 1, kind: input, shape index: {}]
  %s2 = inlined_call_operand.hbm [shape: f32[8,12], index: 2, kind: input, shape index: {}]
  %s3 = inlined_call_operand.vmem [shape: f32[8,1], index: 3, kind: input, shape index: {}]
  %s4 = inlined_call_operand.hbm [shape: f32[2,8,16], index: 4, kind: output, shape index: {}]
  %s5 = sld [smem:[#allocation0]]
  $region57: #{tpu_custom_call.1} parent=0
    _
  %s7 = ssub.s32 1, %s5
  %s8 = scalar_select 0, %s7, %s5
  $region1: #{tpu_custom_call.1} parent=0
    #allocation2 [shape = 'u8[4096]{0}', space=vmem, size = 0x1000, scoped, tag = 'input window, operand 1']
    #allocation3 [shape = 's32[2]{0}', space=sflag, size = 0x8, scoped, tag = 'scoped memory for tpu_custom_call.1']
    #allocation4 [shape = 's32[2]{0}', space=sflag, size = 0x8, scoped, tag = 'scoped memory for tpu_custom_call.1']
    #allocation5 [shape = 'u8[4096]{0}', space=vmem, size = 0x1000, scoped, tag = 'input window, operand 2, single buffered']
    #allocation6 [shape = 's32[1]{0}', space=sflag, size = 0x4, scoped, tag = 'scoped memory for tpu_custom_call.1']
    #allocation7 [shape = 'u8[8192]{0}', space=vmem, size = 0x2000, scoped, tag = 'output window, operand 0']
    %9 = vsyncpa [#allocation3], 0
    %s10 = scalar_lea.sflag [#allocation3], 1
    %11 = vsyncpa %s10, 0
    %12 = vsyncpa [#allocation6], 0
    %13 = vsyncpa [#allocation4], 0
    %s14 = scalar_lea.sflag [#allocation4], 1
    %15 = vsyncpa %s14, 0
    loop: start=0, step=1, limit=4
    $region2: #{tpu_custom_call.1} parent=1 // loop_pre_header
      _
    $region3: #{tpu_custom_call.1} parent=1 // loop_header
      %s17 = sphi 0, %s21
      %p18 = scmp.ge.s32.totalorder %s17, 4
      %s24 = sphi 0, %s36
      %s25 = sphi 0, %s32
      %s26 = sphi 0, %s24
      %s27 = sphi 0, %s25
      %s28 = sphi 0, %s26
      %s29 = sphi 0, %s27
      %s41 = sphi 0, %s43
      %s44 = sphi 0, %s41
      %s45 = sphi 0, %s44
      %s61 = sphi 0, %s45
      %s75 = sphi 0, %s77
      %s78 = sphi 0, %s75
      %s79 = sphi 0, %s78
      %s95 = sphi 0, %s79
      %s99 = sphi 0, %s99
      %s101 = sphi 0, %s99
      %s102 = sphi 0, %s101
      %s116 = sphi 0, %s102
      %s120 = sphi 0, %s120
      %s122 = sphi 0, %s120
      %s123 = sphi 0, %s122
      %s137 = sphi 0, %s123
      %s145 = sphi 0, %s147
      %s148 = sphi 0, %s145
      %s149 = sphi 0, %s148
      %s165 = sphi 0, %s149
    $region4: #{tpu_custom_call.1} parent=1 // loop_header_branch
      %20 = sbr.rel (%p18) target = $region8
    $region5: #{tpu_custom_call.1} parent=1 // loop_body
      %s22 = ssub.s32 %s17, 1
      %s23 = ssub.s32 %s17, 2
      %s30 = sadd.s32 1, %s25
      %p31 = scmp.ge.s32.totalorder %s30, 1
      %s32 = scalar_select %p31, 0, %s30
      %s33 = sadd.s32 1, %s24
      %s34 = scalar_select %p31, %s33, %s24
      %p35 = scmp.ge.s32.totalorder %s34, 2
      %s36 = scalar_select %p35, 0, %s34
      %s37 = ssub.s32 %s24, %s36
      %s38 = ssub.s32 %s25, %s32
      %s39 = sor.u32 %s37, %s38
      %p40 = scmp.eq.s32.totalorder %s39, 0
      %s42 = sadd.s32 %s41, 1
      %s43 = scalar_select %p40, %s41, %s42
      %p46 = pneg %p40
      %p47 = scmp.eq.s32.totalorder %s17, 1
      %p48 = por %p46, %p47
      %p49 = scmp.ne.s32.totalorder %s41, %s44
      %p50 = scmp.eq.s32.totalorder %s17, 0
      %p51 = por %p49, %p50
      %p52 = scmp.ne.s32.totalorder %s41, %s44
      %p53 = scmp.eq.s32.totalorder %s22, 1
      %p54 = por %p52, %p53
      %p55 = scmp.ne.s32.totalorder %s44, %s45
      %p56 = scmp.eq.s32.totalorder %s22, 0
      %p57 = por %p55, %p56
      %p58 = scmp.ne.s32.totalorder %s44, %s45
      %p59 = scmp.eq.s32.totalorder %s23, 1
      %p60 = por %p58, %p59
      %p62 = scmp.ne.s32.totalorder %s45, %s61
      %p63 = scmp.eq.s32.totalorder %s23, 0
      %p64 = por %p62, %p63
      %s65 = ssub.s32 %s25, 1
      %p66 = scmp.gt.s32.totalorder %s65, 0
      %s67 = scalar_select %p66, %s65, 0
      %s68 = ssub.s32 %s32, 1
      %p69 = scmp.gt.s32.totalorder %s68, 0
      %s70 = scalar_select %p69, %s68, 0
      %s71 = ssub.s32 %s24, %s36
      %s72 = ssub.s32 %s67, %s70
      %s73 = sor.u32 %s71, %s72
      %p74 = scmp.eq.s32.totalorder %s73, 0
      %s76 = sadd.s32 %s75, 1
      %s77 = scalar_select %p74, %s75, %s76
      %p80 = pneg %p74
      %p81 = scmp.eq.s32.totalorder %s17, 1
      %p82 = por %p80, %p81
      %p83 = scmp.ne.s32.totalorder %s75, %s78
      %p84 = scmp.eq.s32.totalorder %s17, 0
      %p85 = por %p83, %p84
      %p86 = scmp.ne.s32.totalorder %s75, %s78
      %p87 = scmp.eq.s32.totalorder %s22, 1
      %p88 = por %p86, %p87
      %p89 = scmp.ne.s32.totalorder %s78, %s79
      %p90 = scmp.eq.s32.totalorder %s22, 0
      %p91 = por %p89, %p90
      %p92 = scmp.ne.s32.totalorder %s78, %s79
      %p93 = scmp.eq.s32.totalorder %s23, 1
      %p94 = por %p92, %p93
      %p96 = scmp.ne.s32.totalorder %s79, %s95
      %p97 = scmp.eq.s32.totalorder %s23, 0
      %p98 = por %p96, %p97
      %s100 = sadd.s32 %s99, 1
      %p103 = scmp.eq.s32.totalorder %s17, 1
      %p104 = scmp.ne.s32.totalorder %s99, %s101
      %p105 = scmp.eq.s32.totalorder %s17, 0
      %p106 = por %p104, %p105
      %p107 = scmp.ne.s32.totalorder %s99, %s101
      %p108 = scmp.eq.s32.totalorder %s22, 1
      %p109 = por %p107, %p108
      %p110 = scmp.ne.s32.totalorder %s101, %s102
      %p111 = scmp.eq.s32.totalorder %s22, 0
      %p112 = por %p110, %p111
      %p113 = scmp.ne.s32.totalorder %s101, %s102
      %p114 = scmp.eq.s32.totalorder %s23, 1
      %p115 = por %p113, %p114
      %p117 = scmp.ne.s32.totalorder %s102, %s116
      %p118 = scmp.eq.s32.totalorder %s23, 0
      %p119 = por %p117, %p118
      %s121 = sadd.s32 %s120, 1
      %p124 = scmp.eq.s32.totalorder %s17, 1
      %p125 = scmp.ne.s32.totalorder %s120, %s122
      %p126 = scmp.eq.s32.totalorder %s17, 0
      %p127 = por %p125, %p126
      %p128 = scmp.ne.s32.totalorder %s120, %s122
      %p129 = scmp.eq.s32.totalorder %s22, 1
      %p130 = por %p128, %p129
      %p131 = scmp.ne.s32.totalorder %s122, %s123
      %p132 = scmp.eq.s32.totalorder %s22, 0
      %p133 = por %p131, %p132
      %p134 = scmp.ne.s32.totalorder %s122, %s123
      %p135 = scmp.eq.s32.totalorder %s23, 1
      %p136 = por %p134, %p135
      %p138 = scmp.ne.s32.totalorder %s123, %s137
      %p139 = scmp.eq.s32.totalorder %s23, 0
      %p140 = por %p138, %p139
      %s141 = ssub.s32 %s24, %s36
      %s142 = ssub.s32 %s25, %s32
      %s143 = sor.u32 %s141, %s142
      %p144 = scmp.eq.s32.totalorder %s143, 0
      %s146 = sadd.s32 %s145, 1
      %s147 = scalar_select %p144, %s145, %s146
      %p150 = pneg %p144
      %p151 = scmp.eq.s32.totalorder %s17, 1
      %p152 = por %p150, %p151
      %p153 = scmp.ne.s32.totalorder %s145, %s148
      %p154 = scmp.eq.s32.totalorder %s17, 0
      %p155 = por %p153, %p154
      %p156 = scmp.ne.s32.totalorder %s145, %s148
      %p157 = scmp.eq.s32.totalorder %s22, 1
      %p158 = por %p156, %p157
      %p159 = scmp.ne.s32.totalorder %s148, %s149
      %p160 = scmp.eq.s32.totalorder %s22, 0
      %p161 = por %p159, %p160
      %p162 = scmp.ne.s32.totalorder %s148, %s149
      %p163 = scmp.eq.s32.totalorder %s23, 1
      %p164 = por %p162, %p163
      %p166 = scmp.ne.s32.totalorder %s149, %s165
      %p167 = scmp.eq.s32.totalorder %s23, 0
      %p168 = por %p166, %p167
      %p169 = scmp.le.s32.totalorder 1, %s17
      %p170 = scmp.lt.s32.totalorder %s17, 3
      %p171 = pnand %p169, %p170
      %p172 = pneg %p171
      // Predicated region
      $region9: #{tpu_custom_call.1} parent=5 // pred_check
        _
      $region10: #{tpu_custom_call.1} parent=5 // pred_check_branch
        %174 = sbr.rel (%p171) target = $region12
      $region11: #{tpu_custom_call.1} parent=5 // pred_region
        %s175 = ssub.s32 %s17, 1
        // Predicated region
        $region13: #{tpu_custom_call.1} parent=11 // pred_check
          %p176 = pneg %p112
        $region14: #{tpu_custom_call.1} parent=11 // pred_check_branch
          %178 = sbr.rel (%p176) target = $region16
        $region15: #{tpu_custom_call.1} parent=11 // pred_region
          %180 = vsyncadd [#allocation6], 0
          %s182 = sshll.u32 %s2, 4
          %s183 = int_to_ptr.hbm [resolvable:$true] %s182
          %s184 = sshll.u32 [#allocation5], 4
          %s185 = int_to_ptr.vmem [resolvable:$true] %s184
          %187 = dma.hbm_to_vmem [thread:$0]  %s183, 128, %s185, [#allocation6]
        $region16: #{tpu_custom_call.1} parent=11 // pred_fallthru
          _
        // Predicated region
        $region17: #{tpu_custom_call.1} parent=11 // pred_check
          %p188 = pneg %p133
        $region18: #{tpu_custom_call.1} parent=11 // pred_check_branch
          %190 = sbr.rel (%p188) target = $region20
        $region19: #{tpu_custom_call.1} parent=11 // pred_region
          _
        $region20: #{tpu_custom_call.1} parent=11 // pred_fallthru
          _
      $region12: #{tpu_custom_call.1} parent=5 // pred_fallthru
        _
      %p191 = scmp.lt.s32.totalorder %s17, 2
      // Predicated region
      $region21: #{tpu_custom_call.1} parent=5 // pred_check
        %p192 = pneg %p191
      $region22: #{tpu_custom_call.1} parent=5 // pred_check_branch
        %194 = sbr.rel (%p192) target = $region24
      $region23: #{tpu_custom_call.1} parent=5 // pred_region
        // Predicated region
        $region25: #{tpu_custom_call.1} parent=23 // pred_check
          %p195 = pneg %p51
        $region26: #{tpu_custom_call.1} parent=23 // pred_check_branch
          %197 = sbr.rel (%p195) target = $region28
        $region27: #{tpu_custom_call.1} parent=23 // pred_region
          %p198 = scmp.lt.s32.totalorder %s24, 1
          %s199 = scalar_select %p198, %s24, 1
          %p200 = scmp.lt.s32.totalorder %s25, 0
          %s201 = scalar_select %p200, %s25, 0
          %s202 = sadd.s32 %s201, %s199
          %s203 = smul.addr %s202, 4
          %s204 = scalar_lea.vmem %s0, %s203
        $region28: #{tpu_custom_call.1} parent=23 // pred_fallthru
          _
        // Predicated region
        $region29: #{tpu_custom_call.1} parent=23 // pred_check
          %p205 = pneg %p85
        $region30: #{tpu_custom_call.1} parent=23 // pred_check_branch
          %207 = sbr.rel (%p205) target = $region32
        $region31: #{tpu_custom_call.1} parent=23 // pred_region
          %s208 = sand.u32 %s75, 1
          %s209 = scalar_lea.sflag [#allocation3], %s208
          %s210 = sand.u32 %s75, 1
          %s211 = smul.addr %s210, 4
          %s212 = scalar_lea.vmem [#allocation2], %s211
          %s213 = ssub.s32 %s25, 1
          %p214 = scmp.gt.s32.totalorder %s213, 0
          %s215 = scalar_select %p214, %s213, 0
          %217 = vsyncadd %s209, 0
          %s218 = sadd.s32 %s215, %s24
          %s219 = smul.addr %s218, 4
          %s220 = scalar_lea.hbm %s1, %s219
          %s222 = sshll.u32 %s220, 4
          %s223 = int_to_ptr.hbm [resolvable:$true] %s222
          %s224 = sshll.u32 %s212, 4
          %s225 = int_to_ptr.vmem [resolvable:$true] %s224
          %227 = dma.hbm_to_vmem [thread:$0]  %s223, 64, %s225, %s209
        $region32: #{tpu_custom_call.1} parent=23 // pred_fallthru
          _
      $region24: #{tpu_custom_call.1} parent=5 // pred_fallthru
        _
      %p228 = scmp.le.s32.totalorder 1, %s17
      %p229 = scmp.lt.s32.totalorder %s17, 3
      %p230 = pnand %p228, %p229
      %p231 = pneg %p230
      // Predicated region
      $region33: #{tpu_custom_call.1} parent=5 // pred_check
        _
      $region34: #{tpu_custom_call.1} parent=5 // pred_check_branch
        %233 = sbr.rel (%p230) target = $region36
      $region35: #{tpu_custom_call.1} parent=5 // pred_region
        %s234 = ssub.s32 %s17, 1
        %s235 = sand.u32 %s78, 1
        %s236 = scalar_lea.sflag [#allocation3], %s235
        %s237 = sand.u32 %s78, 1
        %s238 = smul.addr %s237, 4
        %s239 = scalar_lea.vmem [#allocation2], %s238
        // Predicated region
        $region37: #{tpu_custom_call.1} parent=35 // pred_check
          %p240 = pneg %p91
        $region38: #{tpu_custom_call.1} parent=35 // pred_check_branch
          %242 = sbr.rel (%p240) target = $region40
        $region39: #{tpu_custom_call.1} parent=35 // pred_region
          %244 = dma.done %s236, 64
        $region40: #{tpu_custom_call.1} parent=35 // pred_fallthru
          _
        // Predicated region
        $region41: #{tpu_custom_call.1} parent=35 // pred_check
          %p245 = pneg %p112
        $region42: #{tpu_custom_call.1} parent=35 // pred_check_branch
          %247 = sbr.rel (%p245) target = $region44
        $region43: #{tpu_custom_call.1} parent=35 // pred_region
          %249 = dma.done [#allocation6], 128
        $region44: #{tpu_custom_call.1} parent=35 // pred_fallthru
          _
        %p250 = scmp.lt.s32.totalorder %s26, 1
        %s251 = scalar_select %p250, %s26, 1
        %p252 = scmp.lt.s32.totalorder %s27, 0
        %s253 = scalar_select %p252, %s27, 0
        %s254 = sadd.s32 %s253, %s251
        %s255 = smul.addr %s254, 4
        %s256 = scalar_lea.vmem %s0, %s255
        %p257 = pneg %p57
        %p258 = pneg %p54
        %s259 = sand.u32 %s78, 1
        %s260 = scalar_lea.sflag [#allocation3], %s259
        %s261 = sand.u32 %s78, 1
        %s262 = smul.addr %s261, 4
        %s263 = scalar_lea.vmem [#allocation2], %s262
        %p264 = pneg %p91
        %p265 = pneg %p88
        %p266 = pneg %p112
        %p267 = pneg %p109
        %p268 = pneg %p133
        %p269 = pneg %p130
        %p270 = pneg %p161
        %p271 = pneg %p158
        %s272 = sand.u32 %s148, 1
        %s273 = scalar_lea.sflag [#allocation4], %s272
        %s274 = sand.u32 %s148, 1
        %s275 = smul.addr %s274, 8
        %s276 = scalar_lea.vmem [#allocation7], %s275
        %p277 = scmp.lt.s32.totalorder %s26, 1
        %s278 = scalar_select %p277, %s26, 1
        %p279 = scmp.lt.s32.totalorder %s27, 0
        %s280 = scalar_select %p279, %s27, 0
        %s281 = sadd.s32 %s280, %s278
        %s282 = smul.addr %s281, 4
        %s283 = scalar_lea.vmem %s0, %s282
        %s284 = ssub.s32 %s27, 1
        %p285 = scmp.gt.s32.totalorder %s284, 0
        %s286 = scalar_select %p285, %s284, 0
        %v287 = vld [vmem:[%s283] sm:$0xf]
        %v288 = vld [vmem:[%s239] sm:$0xf]
        %p289 = scmp.gt.s32.totalorder %s27, 0
        %s290 = scalar_select %p289, 1, 0
        %s291 = scvt.s32.f32 %s290
        %v292 = vstv %s291
        %v293 = vmul.f32 %v288, %v292
        %295 = vrot.lane.b32.xlu0 %v293, 114
        %v296 = vpop.permute.xlu0 %295
        %299 = vrot.lane.b32.xlu0 %v287, 2
        %v300 = vpop.permute.xlu0 %299
        %vm302 = vcmask 15360
        %v303 = vsel %vm302, %v296, %v300
        %v305 = vrot.slane %v303, 4
        %306 = vrot.lane.b32.xlu0 %v305, 127
        %v307 = vpop.permute.xlu0 %306
        %309 = vrot.lane.b32.xlu0 %v303, 126
        %v310 = vpop.permute.xlu0 %309
        %vm311 = vcmask 1043456
        %v312 = vsel %vm311, %v303, %v307
        %v313 = vld [vmem:[#allocation5] sm:$0xff]
        %v314 = vld [vmem:[%s3] sm:$0xff]
        %316 = vset.pattern.permute.xlu0 0
        %317 = vperm.xlu0 %316, %v314
        %v318 = vpop.permute.xlu0 %317
        %vm320 = vcmask 97280
        %v322 = vsel %vm320, %v313, 0
        %v324 = vsel %vm311, %v310, 0
        %326 = vmatpush.msra.mxu0 0.0
        %327 = vmatpush.msra.mxu0 0.0
        %328 = vmatpush.msra.mxu0 0.0
        %329 = vmatpush.msra.mxu0 0.0
        %330 = vmatpush.msra.mxu0 0.0
        %331 = vmatpush.msra.mxu0 0.0
        %332 = vmatpush.msra.mxu0 0.0
        %333 = vmatpush.msra.mxu0 0.0
        %334 = vmatpush.msra.mxu0 0.0
        %335 = vmatpush.msra.mxu0 0.0
        %336 = vmatpush.msra.mxu0 0.0
        %337 = vmatpush.msra.mxu0 0.0
        %338 = vmatpush.msra.mxu0 0.0
        %339 = vmatpush.msra.mxu0 0.0
        %340 = vmatpush.msra.mxu0 %v324
        %341 = vmatpush.msra.mxu0 %v312
        %342 = vmatmul.f32.gmra.mxu0 %v322
        %v343 = vpop.f32.mrf.mxu0
        %v344 = vadd.f32 %v318, %v343
        %345 = vdwg.mxu0
        %vm346 = vcmask 130048
        %347 = vst.msk [vmem:[%s276] sm:$0xff] %vm346, %v344
        %s348 = sand.u32 %s148, 1
        %s349 = scalar_lea.sflag [#allocation4], %s348
        %s350 = sand.u32 %s148, 1
        %s351 = smul.addr %s350, 8
        %s352 = scalar_lea.vmem [#allocation7], %s351
        // Predicated region
        $region45: #{tpu_custom_call.1} parent=35 // pred_check
          %p353 = pneg %p158
        $region46: #{tpu_custom_call.1} parent=35 // pred_check_branch
          %355 = sbr.rel (%p353) target = $region48
        $region47: #{tpu_custom_call.1} parent=35 // pred_region
          %357 = vsyncadd %s349, 0
          %s358 = sadd.s32 %s27, %s26
          %s359 = smul.addr %s358, 8
          %s360 = scalar_lea.hbm %s4, %s359
          %s362 = sshll.u32 %s352, 4
          %s363 = int_to_ptr.vmem [resolvable:$true] %s362
          %s364 = sshll.u32 %s360, 4
          %s365 = int_to_ptr.hbm [resolvable:$true] %s364
          %367 = dma.vmem_to_hbm [thread:$0]  %s363, 128, %s365, %s349
        $region48: #{tpu_custom_call.1} parent=35 // pred_fallthru
          _
      $region36: #{tpu_custom_call.1} parent=5 // pred_fallthru
        _
      %p368 = scmp.le.s32.totalorder 2, %s17
      // Predicated region
      $region49: #{tpu_custom_call.1} parent=5 // pred_check
        %p369 = pneg %p368
      $region50: #{tpu_custom_call.1} parent=5 // pred_check_branch
        %371 = sbr.rel (%p369) target = $region52
      $region51: #{tpu_custom_call.1} parent=5 // pred_region
        %s372 = ssub.s32 %s17, 2
        // Predicated region
        $region53: #{tpu_custom_call.1} parent=51 // pred_check
          %p373 = pneg %p164
        $region54: #{tpu_custom_call.1} parent=51 // pred_check_branch
          %375 = sbr.rel (%p373) target = $region56
        $region55: #{tpu_custom_call.1} parent=51 // pred_region
          %s376 = sand.u32 %s149, 1
          %s377 = scalar_lea.sflag [#allocation4], %s376
          %s378 = sand.u32 %s149, 1
          %s379 = smul.addr %s378, 8
          %s380 = scalar_lea.vmem [#allocation7], %s379
          %382 = dma.done %s377, 128
        $region56: #{tpu_custom_call.1} parent=51 // pred_fallthru
          _
      $region52: #{tpu_custom_call.1} parent=5 // pred_fallthru
        _
    $region6: #{tpu_custom_call.1} parent=1 // loop_footer
      %s21 = sadd.s32 1, %s17
    $region7: #{tpu_custom_call.1} parent=1 // loop_footer_branch
      %16 = sbr.rel target = $region3
    $region8: #{tpu_custom_call.1} parent=1 // loop_exit
      _
    %383 = vsyncpa [#allocation3], 1
    %s384 = scalar_lea.sflag [#allocation3], 1
    %385 = vsyncpa %s384, 1
    %386 = vsyncpa [#allocation6], 1
    %387 = vsyncpa [#allocation4], 1
    %s388 = scalar_lea.sflag [#allocation4], 1
    %389 = vsyncpa %s388, 1

</llo_original>
